<compile_context>
chip_gen: v7x
topology: tpu7x:2x2x1
jax: 0.10.0
libtpu: 0.0.40
codegen_flags: <defaults>
</compile_context>

<pallas_src>
import numpy as np

import jax
import jax.numpy as jnp
from jax.experimental import pallas as pl
from jax.experimental.pallas import tpu as pltpu


def _round_up(x, m):
    return ((x + m - 1) // m) * m


def _vmem_budget_bytes():
    """Generation-aware safe VMEM budget (headroom for compiler scratch)."""
    try:
        cap = int(pltpu.get_tpu_info().vmem_capacity_bytes)
    except Exception:
        cap = 64 * 1024 * 1024  # conservative default: assume v7x-sized VMEM
    # ~75% of physical: v7x (64 MiB) -> 48 MiB, v5e/v6e (128 MiB) -> 96 MiB.
    return min((cap * 3) // 4, 96 * 1024 * 1024)


def _pick_m_tiling(M, target):
    """Return (tile_m, M_pad): largest tile <= target with <= 64 padded rows."""
    M8 = _round_up(M, 8)
    if M8 <= target:
        return M8, M8                     # single tile over M
    for c in range(target, 7, -8):        # always terminates by c == 64
        M_pad = _round_up(M, c)
        if M_pad - M <= 64:
            return c, M_pad
    return 8, M8


def _pick_tile_n(N_pad, K, tile_m, budget, x_bytes, w_bytes, o_bytes):
    """Largest 128-multiple divisor of N_pad whose pipelined footprint fits."""
    def footprint(tn):
        return 2 * (tile_m * K * x_bytes          # x block (double-buffered)
                    + K * tn * w_bytes            # weight block
                    + tn * w_bytes                # bias block
                    + tile_m * tn * o_bytes)      # output block
    for tn in range(N_pad, 127, -128):
        if N_pad % tn == 0 and footprint(tn) <= budget:
            return tn
    return 128


def _sine_layer_kernel(x_ref, w_ref, b_ref, o_ref):
    # omega_0 is pre-folded into w/b by the wrapper.  MXU matmul with f32
    # accumulation; bias add + sin (VPU polynomial) stay in f32.
    y = jnp.dot(x_ref[...], w_ref[...], preferred_element_type=jnp.float32)
    o_ref[...] = jnp.sin(y + b_ref[...].astype(jnp.float32)).astype(o_ref.dtype)


def _sine_layer_fma_kernel(x_ref, w_ref, b_ref, o_ref):
    # Degenerate first SIREN layer (in_features <= 4): the MXU would run at
    # ~K/256 utilization, so do the "matmul" as K broadcast FMAs on the VPU
    # (full f32, no bf16 demotion); the layer is then store-bandwidth bound.
    x = x_ref[...].astype(jnp.float32)
    w = w_ref[...].astype(jnp.float32)
    y = jnp.broadcast_to(b_ref[...].astype(jnp.float32), (x.shape[0], w.shape[1]))
    for k in range(x.shape[1]):            # static unroll, K <= 4
        y = y + x[:, k:k + 1] * w[k:k + 1, :]
    o_ref[...] = jnp.sin(y).astype(o_ref.dtype)


def sine_layer(x, weight, bias, omega_0=30.0, *, tile_m_target=512):
    """SIREN sine layer forward:  sin(omega_0 * (x @ W.T + b)).

    x:      (..., in_features)
    weight: (out_features, in_features)  -- torch nn.Linear layout
    bias:   (out_features,)
    """
    out_features, in_features = weight.shape
    assert x.shape[-1] == in_features

    lead_shape = x.shape[:-1]
    M = int(np.prod(lead_shape)) if lead_shape else 1
    x2 = x.reshape(M, in_features)

    o_dtype = x.dtype
    x_bytes = np.dtype(x.dtype).itemsize
    w_bytes = np.dtype(weight.dtype).itemsize
    o_bytes = np.dtype(o_dtype).itemsize

    budget = _vmem_budget_bytes()

    # ---- tile sizing --------------------------------------------------------
    # Cap tile_m so the double-buffered x block alone stays within ~1/3 budget
    # (guards very wide in_features until the K-reduction axis exists).
    max_tile_m = max(64, ((budget // 3) // max(1, 2 * in_features * x_bytes)) // 8 * 8)
    tile_m, M_pad = _pick_m_tiling(M, min(tile_m_target, max_tile_m))

    N_pad = _round_up(out_features, 128)
    tile_n = _pick_tile_n(N_pad, in_features, tile_m, budget,
                          x_bytes, w_bytes, o_bytes)

    # ---- operand prep (static per layer; folded under jit) ------------------
    # Fold omega_0 into the (small) weight/bias once, instead of scaling the
    # (tile_m, tile_n) activations every block inside the kernel.
    w_t = (weight * omega_0).T                             # (K, N)
    b2 = (bias * omega_0).reshape(1, out_features)
    if N_pad != out_features:
        w_t = jnp.pad(w_t, ((0, 0), (0, N_pad - out_features)))
        b2 = jnp.pad(b2, ((0, 0), (0, N_pad - out_features)))
    if M_pad != M:
        x2 = jnp.pad(x2, ((0, M_pad - M), (0, 0)))

    # ---- VMEM limit: actual footprint + margin, capped below physical -------
    footprint = 2 * (tile_m * in_features * x_bytes
                     + in_features * tile_n * w_bytes
                     + tile_n * w_bytes
                     + tile_m * tile_n * o_bytes)
    vmem_limit = int(min(budget, max(footprint * 5 // 4 + (2 << 20), 32 << 20)))

    kernel = _sine_layer_fma_kernel if in_features <= 4 else _sine_layer_kernel
    grid = (M_pad // tile_m, N_pad // tile_n)

    out = pl.pallas_call(
        kernel,
        out_shape=jax.ShapeDtypeStruct((M_pad, N_pad), o_dtype),
        grid_spec=pltpu.PrefetchScalarGridSpec(
            num_scalar_prefetch=0,
            grid=grid,
            in_specs=[
                # activation tile: varies with the M index only
                pl.BlockSpec((tile_m, in_features), lambda i, j: (i, 0)),
                # weight tile: varies with the N index only; when tile_n == N_pad
                # the block index never changes -> weight DMA'd exactly once.
                pl.BlockSpec((in_features, tile_n), lambda i, j: (0, j)),
                # bias tile: varies with the N index only
                pl.BlockSpec((1, tile_n), lambda i, j: (0, j)),
            ],
            out_specs=pl.BlockSpec((tile_m, tile_n), lambda i, j: (i, j)),
        ),
        compiler_params=pltpu.CompilerParams(
            dimension_semantics=("parallel", "parallel"),
            vmem_limit_bytes=vmem_limit,
        ),
    )(x2, w_t, b2)

    if M_pad != M or N_pad != out_features:
        out = out[:M, :out_features]
    return out.reshape(*lead_shape, out_features)


def init_sine_layer_params(key, in_features, out_features, is_first, omega_0):
    """Deterministic SIREN init matching the PyTorch module's init_weights()."""
    kw, kb = jax.random.split(key)
    if is_first:
        bound = 1.0 / in_features
    else:
        bound = np.sqrt(6.0 / in_features) / omega_0
    weight = jax.random.uniform(
        kw, (out_features, in_features), minval=-bound, maxval=bound,
        dtype=jnp.float32)
    # nn.Linear default bias init: U(-1/sqrt(in), 1/sqrt(in))
    b_bound = 1.0 / np.sqrt(in_features)
    bias = jax.random.uniform(
        kb, (out_features,), minval=-b_bound, maxval=b_bound, dtype=jnp.float32)
    return weight, bias


def _check(y, x, w, b, omega_0, atol_exact, atol_matched=None):
    # Exact module semantics in f32 numpy (tolerance covers the MXU's default
    # bf16 operand demotion; pass precision=HIGHEST if bit parity is required).
    xn = np.asarray(x, np.float32)
    wn = np.asarray(w, np.float32)
    bn = np.asarray(b, np.float32)
    y_exact = np.sin(omega_0 * (xn @ wn.T + bn))
    np.testing.assert_allclose(np.asarray(y), y_exact, rtol=0, atol=atol_exact)
    if atol_matched is not None:
        # Same folded operands through XLA's default TPU matmul (matched precision).
        y_matched = jnp.sin(x @ (omega_0 * w).T + omega_0 * b)
        np.testing.assert_allclose(np.asarray(y), np.asarray(y_matched),
                                   rtol=0, atol=atol_matched)


if __name__ == "__main__":
    key = jax.random.PRNGKey(0)
    k_x1, k_p1, k_x2, k_p2, k_x3, k_p3 = jax.random.split(key, 6)
    omega_0 = 30.0

    # --- test 1: small hidden layer (batch=2, seq=8, in=32, out=64) ---------
    x1 = jax.random.normal(k_x1, (2, 8, 32), dtype=jnp.float32)
    w1, b1 = init_sine_layer_params(k_p1, 32, 64, is_first=True, omega_0=omega_0)
    y1 = jax.block_until_ready(sine_layer(x1, w1, b1, omega_0))
    assert y1.shape == (2, 8, 64)
    _check(y1, x1, w1, b1, omega_0, atol_exact=7e-2, atol_matched=2e-3)

    # --- test 2: exercise M-padding and N-padding (non-multiples) -----------
    x2 = jax.random.normal(k_x2, (3, 7, 48), dtype=jnp.float32)   # M=21 -> 24
    w2, b2 = init_sine_layer_params(k_p2, 48, 200, is_first=False, omega_0=omega_0)
    y2 = jax.block_until_ready(sine_layer(x2, w2, b2, omega_0))   # N 200 -> 256
    assert y2.shape == (3, 7, 200)
    _check(y2, x2, w2, b2, omega_0, atol_exact=7e-2, atol_matched=2e-3)

    # --- test 3: degenerate first SIREN layer (coords, in=2) -> VPU FMA path
    x3 = jax.random.uniform(k_x3, (2, 64, 2), dtype=jnp.float32,
                            minval=-1.0, maxval=1.0)
    w3, b3 = init_sine_layer_params(k_p3, 2, 64, is_first=True, omega_0=omega_0)
    y3 = jax.block_until_ready(sine_layer(x3, w3, b3, omega_0))
    assert y3.shape == (2, 64, 64)
    _check(y3, x3, w3, b3, omega_0, atol_exact=2e-3)   # full-f32 path

    print("KERNEL_OK")
</pallas_src>

<mosaic_0001>
module attributes {stable_mosaic.version = 11 : i64} {
  func.func @_sine_layer_kernel(%arg0: i32, %arg1: i32, %arg2: memref<16x32xf32, #tpu.memory_space<vmem>>, %arg3: memref<32x128xf32, #tpu.memory_space<vmem>>, %arg4: memref<1x128xf32, #tpu.memory_space<vmem>>, %arg5: memref<16x128xf32, #tpu.memory_space<vmem>>) attributes {dimension_semantics = [#tpu.dimension_semantics<parallel>, #tpu.dimension_semantics<parallel>], iteration_bounds = array<i64: 1, 1>, scalar_prefetch = 0 : i64, scratch_operands = 0 : i64, tpu.core_type = #tpu.core_type<tc>, window_params = [{transform_indices = @transform_0, window_bounds = array<i64: 16, 32>}, {transform_indices = @transform_1, window_bounds = array<i64: 32, 128>}, {transform_indices = @transform_2, window_bounds = array<i64: 1, 128>}, {transform_indices = @transform_3, window_bounds = array<i64: 16, 128>}]} {
    %c0 = arith.constant 0 : index
    %c0_0 = arith.constant 0 : index
    %0 = vector.load %arg2[%c0, %c0_0] : memref<16x32xf32, #tpu.memory_space<vmem>>, vector<16x32xf32>
    %c0_1 = arith.constant 0 : index
    %c0_2 = arith.constant 0 : index
    %1 = vector.load %arg3[%c0_1, %c0_2] : memref<32x128xf32, #tpu.memory_space<vmem>>, vector<32x128xf32>
    %cst = arith.constant dense<0.000000e+00> : vector<16x128xf32>
    %2 = tpu.matmul %0, %1, %cst {dimension_numbers = #tpu.dot_dimension_numbers<[1], [0], [0], [1], [0, 0, 1, 1], [], []>} : vector<16x32xf32>, vector<32x128xf32>, vector<16x128xf32> -> vector<16x128xf32>
    %c0_3 = arith.constant 0 : index
    %c0_4 = arith.constant 0 : index
    %3 = vector.load %arg4[%c0_3, %c0_4] : memref<1x128xf32, #tpu.memory_space<vmem>>, vector<1x128xf32>
    %4 = vector.broadcast %3 : vector<1x128xf32> to vector<16x128xf32>
    %5 = arith.addf %2, %4 : vector<16x128xf32>
    %6 = math.sin %5 : vector<16x128xf32>
    %c0_5 = arith.constant 0 : index
    %c0_6 = arith.constant 0 : index
    %7 = vector.load %arg5[%c0_5, %c0_6] : memref<16x128xf32, #tpu.memory_space<vmem>>, vector<16x128xf32>
    tpu.vector_store %arg5[%c0_5, %c0_6], %6 {strides = array<i32>} : memref<16x128xf32, #tpu.memory_space<vmem>>, vector<16x128xf32>,
    return
  }
  func.func @transform_0(%arg0: i32, %arg1: i32) -> (i32, i32) {
    %c0_i32 = arith.constant 0 : i32
    %c0_i32_0 = arith.constant 0 : i32
    return %arg0, %c0_i32 : i32, i32
  }
  func.func @transform_1(%arg0: i32, %arg1: i32) -> (i32, i32) {
    %c0_i32 = arith.constant 0 : i32
    %c0_i32_0 = arith.constant 0 : i32
    return %c0_i32, %arg1 : i32, i32
  }
  func.func @transform_2(%arg0: i32, %arg1: i32) -> (i32, i32) {
    %c0_i32 = arith.constant 0 : i32
    %c0_i32_0 = arith.constant 0 : i32
    return %c0_i32, %arg1 : i32, i32
  }
  func.func @transform_3(%arg0: i32, %arg1: i32) -> (i32, i32) {
    %c0_i32 = arith.constant 0 : i32
    return %arg0, %arg1 : i32, i32
  }
}

</mosaic_0001>

<llo_original>
// kernel: tpu_custom_call.1
$region0: #{tpu_custom_call.1}
  #allocation0 [shape = 'u32[]', space=smem, size = 0x4, offset = 0x4, fixed_abs, tag = 'smem constant byte address 0x4 - core index']
  #allocation1 [shape = 'u32[144,128]{1,0:T(1,128)}', space=vmem, size = 0x12000, scoped, tag = 'internal scratch']
  %s0 = inlined_call_operand.hbm [shape: f32[16,32], index: 0, kind: input, shape index: {}]
  %s1 = inlined_call_operand.hbm [shape: f32[32,128], index: 1, kind: input, shape index: {}]
  %s2 = inlined_call_operand.vmem [shape: f32[1,128], index: 2, kind: input, shape index: {}]
  %s3 = inlined_call_operand.hbm [shape: f32[16,128], index: 3, kind: output, shape index: {}]
  %s4 = sld [smem:[#allocation0]]
  $region30: #{tpu_custom_call.1} parent=0
    _
  %s6 = ssub.s32 1, %s4
  %s7 = scalar_select 0, %s6, %s4
  $region1: #{tpu_custom_call.1} parent=0
    #allocation2 [shape = 'u8[8192]{0}', space=vmem, size = 0x2000, scoped, tag = 'input window, operand 0, single buffered']
    #allocation3 [shape = 's32[1]{0}', space=sflag, size = 0x4, scoped, tag = 'scoped memory for tpu_custom_call.1']
    #allocation4 [shape = 's32[1]{0}', space=sflag, size = 0x4, scoped, tag = 'scoped memory for tpu_custom_call.1']
    #allocation5 [shape = 'u8[16384]{0}', space=vmem, size = 0x4000, scoped, tag = 'input window, operand 1, single buffered']
    #allocation6 [shape = 's32[1]{0}', space=sflag, size = 0x4, scoped, tag = 'scoped memory for tpu_custom_call.1']
    #allocation7 [shape = 'u8[8192]{0}', space=vmem, size = 0x2000, scoped, tag = 'output window, operand 0, single buffered']
    %8 = vsyncpa [#allocation3], 0
    %9 = vsyncpa [#allocation6], 0
    %10 = vsyncpa [#allocation4], 0
    // Predicated region
    $region2: #{tpu_custom_call.1} parent=1 // pred_check
      _
    $region3: #{tpu_custom_call.1} parent=1 // pred_check_branch
      %12 = sbr.rel (0) target = $region5
    $region4: #{tpu_custom_call.1} parent=1 // pred_region
      %s14 = ssub.s32 256, 256
      %15 = vsyncadd [#allocation3], %s14
      %s16 = sshll.u32 [#allocation2], 4
      %s17 = int_to_ptr.vmem [resolvable:$true] %s16
      %22 = dma.hbm_to_vmem [thread:$0]  %s0, 256, %s17, [#allocation3], 128, 128, 8
    $region5: #{tpu_custom_call.1} parent=1 // pred_fallthru
      _
    // Predicated region
    $region6: #{tpu_custom_call.1} parent=1 // pred_check
      _
    $region7: #{tpu_custom_call.1} parent=1 // pred_check_branch
      %24 = sbr.rel (0) target = $region9
    $region8: #{tpu_custom_call.1} parent=1 // pred_region
      %s26 = ssub.s32 512, 512
      %27 = vsyncadd [#allocation6], %s26
      %s28 = sshll.u32 [#allocation5], 4
      %s29 = int_to_ptr.vmem [resolvable:$true] %s28
      %34 = dma.hbm_to_vmem [thread:$0]  %s1, 512, %s29, [#allocation6], 128, 128, 8
    $region9: #{tpu_custom_call.1} parent=1 // pred_fallthru
      _
    // Predicated region
    $region10: #{tpu_custom_call.1} parent=1 // pred_check
      _
    $region11: #{tpu_custom_call.1} parent=1 // pred_check_branch
      %36 = sbr.rel (0) target = $region13
    $region12: #{tpu_custom_call.1} parent=1 // pred_region
      _
    $region13: #{tpu_custom_call.1} parent=1 // pred_fallthru
      _
    // Predicated region
    $region14: #{tpu_custom_call.1} parent=1 // pred_check
      _
    $region15: #{tpu_custom_call.1} parent=1 // pred_check_branch
      %38 = sbr.rel (0) target = $region17
    $region16: #{tpu_custom_call.1} parent=1 // pred_region
      %39 = dma.done [#allocation3], 256
    $region17: #{tpu_custom_call.1} parent=1 // pred_fallthru
      _
    // Predicated region
    $region18: #{tpu_custom_call.1} parent=1 // pred_check
      _
    $region19: #{tpu_custom_call.1} parent=1 // pred_check_branch
      %41 = sbr.rel (0) target = $region21
    $region20: #{tpu_custom_call.1} parent=1 // pred_region
      %42 = dma.done [#allocation6], 512
    $region21: #{tpu_custom_call.1} parent=1 // pred_fallthru
      _
    %v43 = vld [vmem:[#allocation2] sm:$0xff]
    %v44 = vld [vmem:[#allocation2 + $0x8] sm:$0xff]
    %v45 = vld [vmem:[#allocation5] sm:$0xff]
    %v46 = vld [vmem:[#allocation5 + $0x8] sm:$0xff]
    %v47 = vld [vmem:[#allocation5 + $0x10] sm:$0xff]
    %v48 = vld [vmem:[#allocation5 + $0x18] sm:$0xff]
    %v49 = vld [vmem:[%s2] sm:$0x1]
    %v51 = vlaneseq
    %v52 = vshrl.u32 %v51, 7
    %v53 = vsub.s32 0, %v52
    %v54 = vrot.slane %v49, %v53
    %vm56 = vcmask 261120
    %v58 = vsel %vm56, %v43, 0
    %v61 = vsel %vm56, %v44, 0
    %63 = vmatprep.subr.mxu0 0.0
    %64 = vmatpush1.msra.mxu0 %v45
    %65 = vmatprep.subr.mxu0 0.0
    %66 = vmatpush1.msra.mxu0 %v46
    %67 = vmatprep.subr.mxu0 0.0
    %68 = vmatpush1.msra.mxu0 %v47
    %69 = vmatprep.subr.mxu0 0.0
    %70 = vmatpush1.msra.mxu0 %v48
    %71 = vmatprep.subr.mxu0 0.0
    %72 = vmatpush1.msra.mxu0 0.0
    %73 = vmatprep.subr.mxu0 0.0
    %74 = vmatpush1.msra.mxu0 0.0
    %75 = vmatprep.subr.mxu0 0.0
    %76 = vmatpush1.msra.mxu0 0.0
    %77 = vmatprep.subr.mxu0 0.0
    %78 = vmatpush1.msra.mxu0 0.0
    %79 = vmatprep.subr.mxu0 0.0
    %80 = vmatpush1.msra.mxu0 0.0
    %81 = vmatprep.subr.mxu0 0.0
    %82 = vmatpush1.msra.mxu0 0.0
    %83 = vmatprep.subr.mxu0 0.0
    %84 = vmatpush1.msra.mxu0 0.0
    %85 = vmatprep.subr.mxu0 0.0
    %86 = vmatpush1.msra.mxu0 0.0
    %87 = vmatprep.subr.mxu0 0.0
    %88 = vmatpush1.msra.mxu0 0.0
    %89 = vmatprep.subr.mxu0 0.0
    %90 = vmatpush1.msra.mxu0 0.0
    %91 = vmatprep.subr.mxu0 0.0
    %92 = vmatpush1.msra.mxu0 0.0
    %93 = vmatprep.subr.mxu0 0.0
    %94 = vmatpush1.msra.mxu0 0.0
    %95 = vmatprep.subr.mxu0 0.0
    %96 = vmatpush1.msra.mxu0 0.0
    %97 = vmatprep.subr.mxu0 0.0
    %98 = vmatpush1.msra.mxu0 0.0
    %99 = vmatprep.subr.mxu0 0.0
    %100 = vmatpush1.msra.mxu0 0.0
    %101 = vmatprep.subr.mxu0 0.0
    %102 = vmatpush1.msra.mxu0 0.0
    %103 = vmatprep.subr.mxu0 0.0
    %104 = vmatpush1.msra.mxu0 0.0
    %105 = vmatprep.subr.mxu0 0.0
    %106 = vmatpush1.msra.mxu0 0.0
    %107 = vmatprep.subr.mxu0 0.0
    %108 = vmatpush1.msra.mxu0 0.0
    %109 = vmatprep.subr.mxu0 0.0
    %110 = vmatpush1.msra.mxu0 0.0
    %111 = vmatprep.subr.mxu0 0.0
    %112 = vmatpush1.msra.mxu0 0.0
    %113 = vmatprep.subr.mxu0 0.0
    %114 = vmatpush1.msra.mxu0 0.0
    %115 = vmatprep.subr.mxu0 0.0
    %116 = vmatpush1.msra.mxu0 0.0
    %117 = vmatprep.subr.mxu0 0.0
    %118 = vmatpush1.msra.mxu0 0.0
    %119 = vmatprep.subr.mxu0 0.0
    %120 = vmatpush1.msra.mxu0 0.0
    %121 = vmatprep.subr.mxu0 0.0
    %122 = vmatpush1.msra.mxu0 0.0
    %123 = vmatprep.subr.mxu0 0.0
    %124 = vmatpush1.msra.mxu0 0.0
    %125 = vmatprep.subr.mxu0 0.0
    %126 = vmatpush1.msra.mxu0 0.0
    %127 = vmatprep.mubr.f32.mxu0 0.0
    %128 = vmatmul.mubr.f32.gmra.mrb[0].mxu0 %v58
    %v129 = vpop.f32.mrb[0].mxu0
    %v130 = vadd.f32 %v54, %v129
    %v131 = vpop.f32.mrb[0].mxu0
    %132 = vmatprep.mubr.f32.mxu0 0.0
    %133 = vmatmul.mubr.f32.gmra.mrb[0].mxu0 %v61
    %v134 = vpop.f32.mrb[0].mxu0
    %v135 = vadd.f32 %v54, %v134
    %v136 = vpop.f32.mrb[0].mxu0
    %137 = vdwg.mxu0
    %v138 = vand.u32 2147483647, %v130
    %vm139 = vcmp.le.f32.partialorder %v138, 0.7853982
    %vm140 = vcmp.lt.s32.totalorder %v130, 0
    %v141 = vand.u32 %v130, 2139095040
    %v142 = vshrl.u32 %v141, 23
    %v143 = vsub.s32 %v142, 127
    %v144 = vand.u32 2147483647, %v130
    %v145 = vand.u32 %v144, 8388607
    %v146 = vor.u32 %v145, 8388608
    %v147 = vsub.s32 0, %v146
    %v148 = vadd.s32 %v143, 1
    %vm149 = vcmp.gt.s32.totalorder %v148, 0
    %v150 = vsel %vm149, %v148, 0
    %v151 = vshrl.u32 %v150, 5
    %v152 = vand.u32 %v150, 31
    %v153 = vsub.s32 32, %v152
    %v154 = vshrl.u32 683565275, %v153
    %v155 = vshll.u32 683565275, %v152
    %v156 = vshrl.u32 2475754826, %v153
    %v157 = vor.u32 %v155, %v156
    %v158 = vshll.u32 2475754826, %v152
    %v159 = vshrl.u32 2131351028, %v153
    %v160 = vor.u32 %v158, %v159
    %v161 = vshll.u32 2131351028, %v152
    %v162 = vshrl.u32 2102212464, %v153
    %v163 = vor.u32 %v161, %v162
    %v164 = vshll.u32 2102212464, %v152
    %v165 = vshrl.u32 920167782, %v153
    %v166 = vor.u32 %v164, %v165
    %v167 = vshll.u32 920167782, %v152
    %v168 = vshrl.u32 1326507024, %v153
    %v169 = vor.u32 %v167, %v168
    %vm170 = vcmp.lt.s32.totalorder %v151, 1
    %vm171 = vcmp.lt.s32.totalorder %v151, 2
    %vm172 = vcmp.lt.s32.totalorder %v151, 3
    %vm173 = vcmp.lt.s32.totalorder %v151, 4
    %v174 = vsel %vm170, %v154, %v157
    %v175 = vsel %vm173, %v163, 2102212464
    %v176 = vsel %vm172, %v160, %v175
    %v177 = vsel %vm171, %v174, %v176
    %v178 = vsel %vm170, %v157, %v160
    %v179 = vsel %vm173, %v166, 920167782
    %v180 = vsel %vm172, %v163, %v179
    %v181 = vsel %vm171, %v178, %v180
    %v182 = vsel %vm170, %v160, %v163
    %v183 = vsel %vm173, %v169, 1326507024
    %v184 = vsel %vm172, %v166, %v183
    %v185 = vsel %vm171, %v182, %v184
    %v186 = vshll.u32 %v146, 8
    %v187 = vmul.u32.u64.compose %v186, %v185
    %v188 = vextract.low.u32 %v187
    %v189 = vextract.high.u32 %v187
    %v190 = vmul.u32.u64.compose %v186, %v181
    %v191 = vextract.low.u32 %v190
    %v192 = vextract.high.u32 %v190
    %v193 = vmul.u32 %v186, %v177
    %v194 = vadd.s32 %v189, %v191
    %vm195 = vc.u32 %v189, %v191
    %v196 = vadd.s32 %v192, 1
    %v197 = vsel %vm195, %v196, %v192
    %v198 = vadd.s32 %v193, %v197
    %v199 = vadd.s32 %v198, 536870912
    %v200 = vshrl.u32 %v199, 30
    %v201 = vshll.u32 %v200, 30
    %v202 = vsub.s32 %v198, %v201
    %vm203 = vcmp.lt.s32.totalorder %v202, 0
    %v204 = vsub.s32 0, %v202
    %v205 = vsel %vm203, %v204, %v202
    %v206 = vclz %v205
    %v207 = vsub.s32 %v206, 2
    %vm208 = vcmp.gt.s32.totalorder 0, %v207
    %v209 = vsel %vm208, 0, %v207
    %v210 = vsub.s32 32, %v209
    %v211 = vshll.u32 %v202, %v209
    %v212 = vshrl.u32 %v194, %v210
    %v213 = vor.u32 %v211, %v212
    %v214 = vsub.s32 4294967266, %v209
    %v215 = vadd.s32 %v214, 127
    %v216 = vshll.u32 %v215, 23
    %v217 = vor.u32 4788187, %v216
    %v218 = vand.u32 2147483647, %v217
    %v220 = vcvt.s32.f32 %v213
    %v221 = vmul.f32 %v220, %v218
    %v222 = vxor.u32 %v221, 2147483648
    %v223 = vsel %vm140, %v222, %v221
    %v224 = vsub.s32 4, %v200
    %v225 = vsel %vm140, %v224, %v200
    %v226 = vsel %vm139, %v130, %v223
    %v227 = vsel %vm139, 0, %v225
    %v228 = vcosq.f32.pop %v226
    %v229 = vsinq.f32.pop %v226
    %vm230 = vweird.f32 %v130
    %v231 = vadd.s32 %v227, 3
    %v232 = vand.u32 %v231, 3
    %vm233 = vcmp.lt.s32.totalorder %v232, 2
    %vm234 = vcmp.eq.s32.totalorder %v232, 0
    %v235 = vxor.u32 %v229, 2147483648
    %v236 = vsel %vm234, %v228, %v235
    %vm237 = vcmp.eq.s32.totalorder %v232, 2
    %v238 = vxor.u32 %v228, 2147483648
    %v239 = vsel %vm237, %v238, %v229
    %v240 = vsel %vm233, %v236, %v239
    %v241 = vsel %vm230, nan, %v240
    %v242 = vand.u32 2147483647, %v135
    %vm243 = vcmp.le.f32.partialorder %v242, 0.7853982
    %vm244 = vcmp.lt.s32.totalorder %v135, 0
    %v245 = vand.u32 %v135, 2139095040
    %v246 = vshrl.u32 %v245, 23
    %v247 = vsub.s32 %v246, 127
    %v248 = vand.u32 2147483647, %v135
    %v249 = vand.u32 %v248, 8388607
    %v250 = vor.u32 %v249, 8388608
    %v251 = vsub.s32 0, %v250
    %v252 = vadd.s32 %v247, 1
    %vm253 = vcmp.gt.s32.totalorder %v252, 0
    %v254 = vsel %vm253, %v252, 0
    %v255 = vshrl.u32 %v254, 5
    %v256 = vand.u32 %v254, 31
    %v257 = vsub.s32 32, %v256
    %v258 = vshrl.u32 683565275, %v257
    %v259 = vshll.u32 683565275, %v256
    %v260 = vshrl.u32 2475754826, %v257
    %v261 = vor.u32 %v259, %v260
    %v262 = vshll.u32 2475754826, %v256
    %v263 = vshrl.u32 2131351028, %v257
    %v264 = vor.u32 %v262, %v263
    %v265 = vshll.u32 2131351028, %v256
    %v266 = vshrl.u32 2102212464, %v257
    %v267 = vor.u32 %v265, %v266
    %v268 = vshll.u32 2102212464, %v256
    %v269 = vshrl.u32 920167782, %v257
    %v270 = vor.u32 %v268, %v269
    %v271 = vshll.u32 920167782, %v256
    %v272 = vshrl.u32 1326507024, %v257
    %v273 = vor.u32 %v271, %v272
    %vm274 = vcmp.lt.s32.totalorder %v255, 1
    %vm275 = vcmp.lt.s32.totalorder %v255, 2
    %vm276 = vcmp.lt.s32.totalorder %v255, 3
    %vm277 = vcmp.lt.s32.totalorder %v255, 4
    %v278 = vsel %vm274, %v258, %v261
    %v279 = vsel %vm277, %v267, 2102212464
    %v280 = vsel %vm276, %v264, %v279
    %v281 = vsel %vm275, %v278, %v280
    %v282 = vsel %vm274, %v261, %v264
    %v283 = vsel %vm277, %v270, 920167782
    %v284 = vsel %vm276, %v267, %v283
    %v285 = vsel %vm275, %v282, %v284
    %v286 = vsel %vm274, %v264, %v267
    %v287 = vsel %vm277, %v273, 1326507024
    %v288 = vsel %vm276, %v270, %v287
    %v289 = vsel %vm275, %v286, %v288
    %v290 = vshll.u32 %v250, 8
    %v291 = vmul.u32.u64.compose %v290, %v289
    %v292 = vextract.low.u32 %v291
    %v293 = vextract.high.u32 %v291
    %v294 = vmul.u32.u64.compose %v290, %v285
    %v295 = vextract.low.u32 %v294
    %v296 = vextract.high.u32 %v294
    %v297 = vmul.u32 %v290, %v281
    %v298 = vadd.s32 %v293, %v295
    %vm299 = vc.u32 %v293, %v295
    %v300 = vadd.s32 %v296, 1
    %v301 = vsel %vm299, %v300, %v296
    %v302 = vadd.s32 %v297, %v301
    %v303 = vadd.s32 %v302, 536870912
    %v304 = vshrl.u32 %v303, 30
    %v305 = vshll.u32 %v304, 30
    %v306 = vsub.s32 %v302, %v305
    %vm307 = vcmp.lt.s32.totalorder %v306, 0
    %v308 = vsub.s32 0, %v306
    %v309 = vsel %vm307, %v308, %v306
    %v310 = vclz %v309
    %v311 = vsub.s32 %v310, 2
    %vm312 = vcmp.gt.s32.totalorder 0, %v311
    %v313 = vsel %vm312, 0, %v311
    %v314 = vsub.s32 32, %v313
    %v315 = vshll.u32 %v306, %v313
    %v316 = vshrl.u32 %v298, %v314
    %v317 = vor.u32 %v315, %v316
    %v318 = vsub.s32 4294967266, %v313
    %v319 = vadd.s32 %v318, 127
    %v320 = vshll.u32 %v319, 23
    %v321 = vor.u32 4788187, %v320
    %v322 = vand.u32 2147483647, %v321
    %v324 = vcvt.s32.f32 %v317
    %v325 = vmul.f32 %v324, %v322
    %v326 = vxor.u32 %v325, 2147483648
    %v327 = vsel %vm244, %v326, %v325
    %v328 = vsub.s32 4, %v304
    %v329 = vsel %vm244, %v328, %v304
    %v330 = vsel %vm243, %v135, %v327
    %v331 = vsel %vm243, 0, %v329
    %v332 = vcosq.f32.pop %v330
    %v333 = vsinq.f32.pop %v330
    %vm334 = vweird.f32 %v135
    %v335 = vadd.s32 %v331, 3
    %v336 = vand.u32 %v335, 3
    %vm337 = vcmp.lt.s32.totalorder %v336, 2
    %vm338 = vcmp.eq.s32.totalorder %v336, 0
    %v339 = vxor.u32 %v333, 2147483648
    %v340 = vsel %vm338, %v332, %v339
    %vm341 = vcmp.eq.s32.totalorder %v336, 2
    %v342 = vxor.u32 %v332, 2147483648
    %v343 = vsel %vm341, %v342, %v333
    %v344 = vsel %vm337, %v340, %v343
    %v345 = vsel %vm334, nan, %v344
    %346 = vst [vmem:[#allocation7] sm:$0xff] %v241
    %347 = vst [vmem:[#allocation7 + $0x8] sm:$0xff] %v345
    // Predicated region
    $region22: #{tpu_custom_call.1} parent=1 // pred_check
      _
    $region23: #{tpu_custom_call.1} parent=1 // pred_check_branch
      %349 = sbr.rel (0) target = $region25
    $region24: #{tpu_custom_call.1} parent=1 // pred_region
      %s351 = ssub.s32 256, 256
      %352 = vsyncadd [#allocation4], %s351
      %s353 = sshll.u32 [#allocation7], 4
      %s354 = int_to_ptr.vmem [resolvable:$true] %s353
      %359 = dma.vmem_to_hbm [thread:$0]  %s354, 256, %s3, [#allocation4], 128, 128, 8
    $region25: #{tpu_custom_call.1} parent=1 // pred_fallthru
      _
    // Predicated region
    $region26: #{tpu_custom_call.1} parent=1 // pred_check
      _
    $region27: #{tpu_custom_call.1} parent=1 // pred_check_branch
      %361 = sbr.rel (0) target = $region29
    $region28: #{tpu_custom_call.1} parent=1 // pred_region
      %362 = dma.done [#allocation4], 256
    $region29: #{tpu_custom_call.1} parent=1 // pred_fallthru
      _
    %363 = vsyncpa [#allocation3], 1
    %364 = vsyncpa [#allocation6], 1
    %365 = vsyncpa [#allocation4], 1

</llo_original>
